<compile_context>
chip_gen: v6e
topology: v6e:2x2x1
jax: 0.10.0
libtpu: 0.0.40
codegen_flags: <defaults>
</compile_context>

<pallas_src>
import functools

import jax
import jax.numpy as jnp
from jax.experimental import pallas as pl
from jax.experimental.pallas import tpu as pltpu

_LANE = 128
_SUBLANE = 8
_VMEM_TILE_BUDGET = 24 * 1024 * 1024   # target tile footprint (safe on v5e/v6e/v7x)
_VMEM_LIMIT = 48 * 1024 * 1024         # scoped VMEM limit requested from Mosaic


def _round_up(x, m):
    return ((x + m - 1) // m) * m


# ---------------------------------------------------------------------------
# channels_last=True path: (M, C_in) @ (C_in, C_out_p) + b
# ---------------------------------------------------------------------------
def _rows_kernel(x_ref, w_ref, b_ref, o_ref):
    acc = jnp.dot(x_ref[...], w_ref[...], preferred_element_type=jnp.float32)
    o_ref[...] = (acc + b_ref[...]).astype(o_ref.dtype)


def _forward_channels_last(x, weight, bias):
    B, N, C_in = x.shape
    C_out = weight.shape[1]
    M = B * N
    itemsize = jnp.dtype(x.dtype).itemsize

    # Lane-dense output: pad C_out up to a multiple of 128 with zero weight
    # columns / zero bias so output stores are unmasked full-lane vst.
    C_out_p = _round_up(C_out, _LANE)
    if C_out_p != C_out:
        weight = jnp.pad(weight, ((0, 0), (0, C_out_p - C_out)))
        bias = jnp.pad(bias, (0, C_out_p - C_out))
    b2 = bias.reshape(1, C_out_p)

    # C_out tile (lane axis of the output): pick a multiple of 128 that divides
    # C_out_p and keeps the resident (C_in, tn) weight block bounded.
    tn = _LANE
    for cand in (512, 384, 256, 128):
        if C_out_p % cand == 0 and 2 * C_in * cand * itemsize <= _VMEM_TILE_BUDGET // 2:
            tn = cand
            break

    # Fixed large row tile, sized against the VMEM budget (the x block occupies
    # full 128-lane tiles in VMEM even for small C_in, so budget with that).
    lane_cin = _round_up(C_in, _LANE)
    per_row = 2 * (lane_cin + tn) * itemsize           # double-buffered x + out
    w_bytes = 2 * C_in * tn * itemsize
    avail = max(_VMEM_TILE_BUDGET - w_bytes, 1 << 20)
    tm = min(1024, max(_SUBLANE, (avail // per_row) // _SUBLANE * _SUBLANE))
    tm = min(tm, _round_up(M, _SUBLANE))

    # Prefer a divisor of M (>=128 rows) to avoid a pad copy; otherwise pad.
    if M % tm != 0:
        for cand in range(tm, _LANE - 1, -_SUBLANE):
            if M % cand == 0:
                tm = cand
                break

    M_p = _round_up(M, tm)
    x2 = x.reshape(M, C_in)
    if M_p != M:
        x2 = jnp.pad(x2, ((0, M_p - M), (0, 0)))

    grid = (M_p // tm, C_out_p // tn)

    out2 = pl.pallas_call(
        _rows_kernel,
        out_shape=jax.ShapeDtypeStruct((M_p, C_out_p), x.dtype),
        grid_spec=pltpu.PrefetchScalarGridSpec(
            num_scalar_prefetch=0,
            grid=grid,
            in_specs=[
                pl.BlockSpec((tm, C_in), lambda i, j: (i, 0)),
                pl.BlockSpec((C_in, tn), lambda i, j: (0, j)),
                pl.BlockSpec((1, tn), lambda i, j: (0, j)),
            ],
            out_specs=pl.BlockSpec((tm, tn), lambda i, j: (i, j)),
        ),
        compiler_params=pltpu.CompilerParams(
            dimension_semantics=("parallel", "parallel"),
            vmem_limit_bytes=_VMEM_LIMIT,
        ),
        cost_estimate=pl.CostEstimate(
            flops=2 * M_p * C_in * C_out_p,
            transcendentals=0,
            bytes_accessed=itemsize * (M_p * C_in + C_in * C_out_p + M_p * C_out_p),
        ),
    )(x2, weight, b2)

    if M_p != M or C_out_p != C_out:
        out2 = out2[:M, :C_out]
    return out2.reshape(B, N, C_out)


# ---------------------------------------------------------------------------
# channels_last=False path: native (B, C_in, N) layout, out[b] = W @ x[b] + b
# ---------------------------------------------------------------------------
def _cfirst_kernel(x_ref, w_ref, b_ref, o_ref):
    # x_ref: (C_in, tn), w_ref: (C_out, C_in), b_ref: (C_out, 1), o_ref: (C_out, tn)
    acc = jnp.dot(w_ref[...], x_ref[...], preferred_element_type=jnp.float32)
    o_ref[...] = (acc + b_ref[...]).astype(o_ref.dtype)


def _forward_channels_first(x, weight, bias):
    B, C_in, N = x.shape
    C_out = weight.shape[1]
    itemsize = jnp.dtype(x.dtype).itemsize

    w_cf = weight.T                   # (C_out, C_in): tiny one-time transpose
    b2 = bias.reshape(C_out, 1)

    # Lane tile along N (lane-dense input AND output blocks).
    per_col = 2 * (_round_up(C_in, _SUBLANE) + _round_up(C_out, _SUBLANE)) * itemsize
    w_bytes = 2 * C_in * C_out * itemsize
    avail = max(_VMEM_TILE_BUDGET - w_bytes, 1 << 20)
    tn = min(2048, max(_LANE, (avail // per_col) // _LANE * _LANE))
    tn = min(tn, _round_up(N, _LANE))
    if N % tn != 0:
        for cand in range(tn, _LANE - 1, -_LANE):
            if N % cand == 0:
                tn = cand
                break

    N_p = _round_up(N, tn)
    if N_p != N:
        x = jnp.pad(x, ((0, 0), (0, 0), (0, N_p - N)))

    grid = (B, N_p // tn)

    out = pl.pallas_call(
        _cfirst_kernel,
        out_shape=jax.ShapeDtypeStruct((B, C_out, N_p), x.dtype),
        grid_spec=pltpu.PrefetchScalarGridSpec(
            num_scalar_prefetch=0,
            grid=grid,
            in_specs=[
                pl.BlockSpec((None, C_in, tn), lambda b, j: (b, 0, j)),
                pl.BlockSpec((C_out, C_in), lambda b, j: (0, 0)),
                pl.BlockSpec((C_out, 1), lambda b, j: (0, 0)),
            ],
            out_specs=pl.BlockSpec((None, C_out, tn), lambda b, j: (b, 0, j)),
        ),
        compiler_params=pltpu.CompilerParams(
            dimension_semantics=("parallel", "parallel"),
            vmem_limit_bytes=_VMEM_LIMIT,
        ),
        cost_estimate=pl.CostEstimate(
            flops=2 * B * N_p * C_in * C_out,
            transcendentals=0,
            bytes_accessed=itemsize * (B * C_in * N_p + C_in * C_out + B * C_out * N_p),
        ),
    )(x, w_cf, b2)

    if N_p != N:
        out = out[:, :, :N]
    return out


@functools.partial(jax.jit, static_argnames=("channels_last", "use_pallas"))
def unary1d_forward(x, weight, bias=None, channels_last=True, use_pallas=True):
    """Pointwise (kernel_size=1, stride=1, groups=1) Conv1d == Unary1d.forward.

    Args:
        x: (B, N, C_in) if channels_last else (B, C_in, N).
        weight: (C_in, C_out)  -- transposed PyTorch conv weight (C_out, C_in, 1).
        bias:   (C_out,) or None.
        use_pallas: set False to fall back to plain XLA for tiny problems where
            kernel launch overhead dominates.
    """
    C_in, C_out = weight.shape
    if bias is None:
        bias = jnp.zeros((C_out,), weight.dtype)

    if not use_pallas:
        if channels_last:
            return jnp.einsum("bnc,co->bno", x, weight) + bias[None, None, :]
        return jnp.einsum("bcn,co->bon", x, weight) + bias[None, :, None]

    if channels_last:
        return _forward_channels_last(x, weight, bias)
    return _forward_channels_first(x, weight, bias)


def init_unary1d_params(key, in_channels, out_channels, dtype=jnp.float32):
    """Deterministic init mimicking nn.Conv1d default (kaiming-uniform-ish)."""
    kw, kb = jax.random.split(key)
    fan_in = in_channels  # kernel_size = 1
    bound = 1.0 / jnp.sqrt(fan_in)
    # PyTorch stores weight as (C_out, C_in, 1); we keep it as (C_in, C_out).
    weight = jax.random.uniform(kw, (in_channels, out_channels), dtype,
                                minval=-bound, maxval=bound)
    bias = jax.random.uniform(kb, (out_channels,), dtype,
                              minval=-bound, maxval=bound)
    return weight, bias


# TODO(synk): groups > 1 (blocked channel connections) not implemented; the
#             module default groups=1 is what these kernels reproduce.
# TODO(synk): very large C_in (>~8K) would benefit from a K grid axis with a
#             VMEM accumulator; current kernels keep the full C_in resident.
# dilation has no effect for kernel_size=1, so it is correctly a no-op here.


if __name__ == "__main__":
    key = jax.random.PRNGKey(0)
    k_x, k_p = jax.random.split(key)

    B, N, C_in, C_out = 2, 16, 4, 8
    weight, bias = init_unary1d_params(k_p, C_in, C_out)

    # channels_last=True (module default): x is (B, N, C_in)
    x_cl = jax.random.normal(k_x, (B, N, C_in), jnp.float32)
    out_cl = jax.block_until_ready(
        unary1d_forward(x_cl, weight, bias, channels_last=True))
    ref_cl = jnp.einsum("bnc,co->bno", x_cl, weight) + bias[None, None, :]
    assert out_cl.shape == (B, N, C_out)
    assert jnp.allclose(out_cl, ref_cl, atol=1e-5, rtol=1e-5)

    # channels_last=False: x is (B, C_in, N), handled natively (no transposes)
    x_cf = jnp.transpose(x_cl, (0, 2, 1))
    out_cf = jax.block_until_ready(
        unary1d_forward(x_cf, weight, bias, channels_last=False))
    ref_cf = jnp.transpose(ref_cl, (0, 2, 1))
    assert out_cf.shape == (B, C_out, N)
    assert jnp.allclose(out_cf, ref_cf, atol=1e-5, rtol=1e-5)

    print("KERNEL_OK")
</pallas_src>

<mosaic_0001>
module attributes {stable_mosaic.version = 11 : i64} {
  func.func @_rows_kernel(%arg0: i32, %arg1: i32, %arg2: memref<32x4xf32, #tpu.memory_space<vmem>>, %arg3: memref<4x128xf32, #tpu.memory_space<vmem>>, %arg4: memref<1x128xf32, #tpu.memory_space<vmem>>, %arg5: memref<32x128xf32, #tpu.memory_space<vmem>>) attributes {dimension_semantics = [#tpu.dimension_semantics<parallel>, #tpu.dimension_semantics<parallel>], iteration_bounds = array<i64: 1, 1>, scalar_prefetch = 0 : i64, scratch_operands = 0 : i64, tpu.core_type = #tpu.core_type<tc>, window_params = [{transform_indices = @transform_0, window_bounds = array<i64: 32, 4>}, {transform_indices = @transform_1, window_bounds = array<i64: 4, 128>}, {transform_indices = @transform_2, window_bounds = array<i64: 1, 128>}, {transform_indices = @transform_3, window_bounds = array<i64: 32, 128>}]} {
    %c0 = arith.constant 0 : index
    %c0_0 = arith.constant 0 : index
    %0 = vector.load %arg2[%c0, %c0_0] : memref<32x4xf32, #tpu.memory_space<vmem>>, vector<32x4xf32>
    %c0_1 = arith.constant 0 : index
    %c0_2 = arith.constant 0 : index
    %1 = vector.load %arg3[%c0_1, %c0_2] : memref<4x128xf32, #tpu.memory_space<vmem>>, vector<4x128xf32>
    %cst = arith.constant dense<0.000000e+00> : vector<32x128xf32>
    %2 = tpu.matmul %0, %1, %cst {dimension_numbers = #tpu.dot_dimension_numbers<[1], [0], [0], [1], [0, 0, 1, 1], [], []>} : vector<32x4xf32>, vector<4x128xf32>, vector<32x128xf32> -> vector<32x128xf32>
    %c0_3 = arith.constant 0 : index
    %c0_4 = arith.constant 0 : index
    %3 = vector.load %arg4[%c0_3, %c0_4] : memref<1x128xf32, #tpu.memory_space<vmem>>, vector<1x128xf32>
    %4 = vector.broadcast %3 : vector<1x128xf32> to vector<32x128xf32>
    %5 = arith.addf %2, %4 : vector<32x128xf32>
    %c0_5 = arith.constant 0 : index
    %c0_6 = arith.constant 0 : index
    %6 = vector.load %arg5[%c0_5, %c0_6] : memref<32x128xf32, #tpu.memory_space<vmem>>, vector<32x128xf32>
    tpu.vector_store %arg5[%c0_5, %c0_6], %5 {strides = array<i32>} : memref<32x128xf32, #tpu.memory_space<vmem>>, vector<32x128xf32>,
    return
  }
  func.func @transform_0(%arg0: i32, %arg1: i32) -> (i32, i32) {
    %c0_i32 = arith.constant 0 : i32
    %c0_i32_0 = arith.constant 0 : i32
    return %arg0, %c0_i32 : i32, i32
  }
  func.func @transform_1(%arg0: i32, %arg1: i32) -> (i32, i32) {
    %c0_i32 = arith.constant 0 : i32
    %c0_i32_0 = arith.constant 0 : i32
    return %c0_i32, %arg1 : i32, i32
  }
  func.func @transform_2(%arg0: i32, %arg1: i32) -> (i32, i32) {
    %c0_i32 = arith.constant 0 : i32
    %c0_i32_0 = arith.constant 0 : i32
    return %c0_i32, %arg1 : i32, i32
  }
  func.func @transform_3(%arg0: i32, %arg1: i32) -> (i32, i32) {
    %c0_i32 = arith.constant 0 : i32
    return %arg0, %arg1 : i32, i32
  }
}

</mosaic_0001>

<llo_original>
// kernel: unary1d_forward.1
$region0: #{unary1d_forward.1}
  #allocation0 [shape = 'u32[]', space=smem, size = 0x4, offset = 0x4, fixed_abs, tag = 'smem constant byte address 0x4 - core index']
  #allocation1 [shape = 'u32[144,128]{1,0:T(1,128)}', space=vmem, size = 0x12000, scoped, tag = 'internal scratch']
  %s0 = inlined_call_operand.vmem [shape: f32[32,4], index: 0, kind: input, shape index: {}]
  %s1 = inlined_call_operand.vmem [shape: f32[4,128], index: 1, kind: input, shape index: {}]
  %s2 = inlined_call_operand.vmem [shape: f32[1,128], index: 2, kind: input, shape index: {}]
  %s3 = inlined_call_operand.vmem [shape: f32[32,128], index: 3, kind: output, shape index: {}]
  %s4 = sld [smem:[#allocation0]]
  $region22: #{unary1d_forward.1} parent=0
    _
  %s6 = ssub.s32 1, %s4
  %s7 = scalar_select 0, %s6, %s4
  // Predicated region
  $region2: #{unary1d_forward.1} parent=0 // pred_check
    _
  $region3: #{unary1d_forward.1} parent=0 // pred_check_branch
    %9 = sbr.rel (0) target = $region5
  $region4: #{unary1d_forward.1} parent=0 // pred_region
    _
  $region5: #{unary1d_forward.1} parent=0 // pred_fallthru
    _
  // Predicated region
  $region6: #{unary1d_forward.1} parent=0 // pred_check
    _
  $region7: #{unary1d_forward.1} parent=0 // pred_check_branch
    %11 = sbr.rel (0) target = $region9
  $region8: #{unary1d_forward.1} parent=0 // pred_region
    _
  $region9: #{unary1d_forward.1} parent=0 // pred_fallthru
    _
  // Predicated region
  $region10: #{unary1d_forward.1} parent=0 // pred_check
    _
  $region11: #{unary1d_forward.1} parent=0 // pred_check_branch
    %13 = sbr.rel (0) target = $region13
  $region12: #{unary1d_forward.1} parent=0 // pred_region
    _
  $region13: #{unary1d_forward.1} parent=0 // pred_fallthru
    _
  %v14 = vld [vmem:[%s0] sm:$0xff]
  %v15 = vld [vmem:[%s0 + $0x8] sm:$0xff]
  %v16 = vld [vmem:[%s0 + $0x10] sm:$0xff]
  %v17 = vld [vmem:[%s0 + $0x18] sm:$0xff]
  %v18 = vld [vmem:[%s1] sm:$0xf]
  %v19 = vld [vmem:[%s2] sm:$0x1]
  %v21 = vlaneseq
  %v22 = vshrl.u32 %v21, 7
  %v23 = vsub.s32 0, %v22
  %v24 = vrot.slane %v19, %v23
  %vm26 = vcmask 31744
  %v28 = vsel %vm26, %v14, 0
  %v31 = vsel %vm26, %v15, 0
  %v34 = vsel %vm26, %v16, 0
  %v37 = vsel %vm26, %v17, 0
  %vm39 = vcmask 1043456
  %v41 = vsel %vm39, %v18, 0
  %43 = vmatprep.subr.mxu0 0.0
  %44 = vmatpush1.msra.mxu0 0.0
  %45 = vmatprep.subr.mxu0 0.0
  %46 = vmatpush1.msra.mxu0 0.0
  %47 = vmatprep.subr.mxu0 0.0
  %48 = vmatpush1.msra.mxu0 0.0
  %49 = vmatprep.subr.mxu0 0.0
  %50 = vmatpush1.msra.mxu0 0.0
  %51 = vmatprep.subr.mxu0 0.0
  %52 = vmatpush1.msra.mxu0 0.0
  %53 = vmatprep.subr.mxu0 0.0
  %54 = vmatpush1.msra.mxu0 0.0
  %55 = vmatprep.subr.mxu0 0.0
  %56 = vmatpush1.msra.mxu0 0.0
  %57 = vmatprep.subr.mxu0 0.0
  %58 = vmatpush1.msra.mxu0 0.0
  %59 = vmatprep.subr.mxu0 0.0
  %60 = vmatpush1.msra.mxu0 0.0
  %61 = vmatprep.subr.mxu0 0.0
  %62 = vmatpush1.msra.mxu0 0.0
  %63 = vmatprep.subr.mxu0 0.0
  %64 = vmatpush1.msra.mxu0 0.0
  %65 = vmatprep.subr.mxu0 0.0
  %66 = vmatpush1.msra.mxu0 0.0
  %67 = vmatprep.subr.mxu0 0.0
  %68 = vmatpush1.msra.mxu0 0.0
  %69 = vmatprep.subr.mxu0 0.0
  %70 = vmatpush1.msra.mxu0 0.0
  %71 = vmatprep.subr.mxu0 0.0
  %72 = vmatpush1.msra.mxu0 0.0
  %73 = vmatprep.subr.mxu0 0.0
  %74 = vmatpush1.msra.mxu0 %v41
  %75 = vmatprep.subr.mxu0 0.0
  %76 = vmatpush2.msra.mxu0 0.0
  %77 = vmatprep.subr.mxu0 0.0
  %78 = vmatpush2.msra.mxu0 0.0
  %79 = vmatprep.subr.mxu0 0.0
  %80 = vmatpush2.msra.mxu0 0.0
  %81 = vmatprep.subr.mxu0 0.0
  %82 = vmatpush2.msra.mxu0 0.0
  %83 = vmatprep.subr.mxu0 0.0
  %84 = vmatpush2.msra.mxu0 0.0
  %85 = vmatprep.subr.mxu0 0.0
  %86 = vmatpush2.msra.mxu0 0.0
  %87 = vmatprep.subr.mxu0 0.0
  %88 = vmatpush2.msra.mxu0 0.0
  %89 = vmatprep.subr.mxu0 0.0
  %90 = vmatpush2.msra.mxu0 0.0
  %91 = vmatprep.subr.mxu0 0.0
  %92 = vmatpush2.msra.mxu0 0.0
  %93 = vmatprep.subr.mxu0 0.0
  %94 = vmatpush2.msra.mxu0 0.0
  %95 = vmatprep.subr.mxu0 0.0
  %96 = vmatpush2.msra.mxu0 0.0
  %97 = vmatprep.subr.mxu0 0.0
  %98 = vmatpush2.msra.mxu0 0.0
  %99 = vmatprep.subr.mxu0 0.0
  %100 = vmatpush2.msra.mxu0 0.0
  %101 = vmatprep.subr.mxu0 0.0
  %102 = vmatpush2.msra.mxu0 0.0
  %103 = vmatprep.subr.mxu0 0.0
  %104 = vmatpush2.msra.mxu0 0.0
  %105 = vmatprep.subr.mxu0 0.0
  %106 = vmatpush2.msra.mxu0 0.0
  %107 = vmatprep.mubr.f32.mxu0 0.0
  %108 = vmatmul.mubr.f32.gmra.mxu0 %v28
  %v109 = vpop.f32.mrf.mxu0
  %v110 = vadd.f32 %v24, %v109
  %v111 = vpop.f32.mrf.mxu0
  %112 = vmatprep.mubr.f32.mxu0 0.0
  %113 = vmatmul.mubr.f32.gmra.mxu0 %v31
  %v114 = vpop.f32.mrf.mxu0
  %v115 = vadd.f32 %v24, %v114
  %v116 = vpop.f32.mrf.mxu0
  %117 = vmatprep.mubr.f32.mxu0 0.0
  %118 = vmatmul.mubr.f32.gmra.mxu0 %v34
  %v119 = vpop.f32.mrf.mxu0
  %v120 = vadd.f32 %v24, %v119
  %v121 = vpop.f32.mrf.mxu0
  %122 = vmatprep.mubr.f32.mxu0 0.0
  %123 = vmatmul.mubr.f32.gmra.mxu0 %v37
  %v124 = vpop.f32.mrf.mxu0
  %v125 = vadd.f32 %v24, %v124
  %v126 = vpop.f32.mrf.mxu0
  %127 = vdwg.mxu0
  %128 = vst [vmem:[%s3] sm:$0xff] %v110
  %129 = vst [vmem:[%s3 + $0x8] sm:$0xff] %v115
  %130 = vst [vmem:[%s3 + $0x10] sm:$0xff] %v120
  %131 = vst [vmem:[%s3 + $0x18] sm:$0xff] %v125
  // Predicated region
  $region14: #{unary1d_forward.1} parent=0 // pred_check
    _
  $region15: #{unary1d_forward.1} parent=0 // pred_check_branch
    %133 = sbr.rel (0) target = $region17
  $region16: #{unary1d_forward.1} parent=0 // pred_region
    _
  $region17: #{unary1d_forward.1} parent=0 // pred_fallthru
    _
  // Predicated region
  $region18: #{unary1d_forward.1} parent=0 // pred_check
    _
  $region19: #{unary1d_forward.1} parent=0 // pred_check_branch
    %135 = sbr.rel (0) target = $region21
  $region20: #{unary1d_forward.1} parent=0 // pred_region
    _
  $region21: #{unary1d_forward.1} parent=0 // pred_fallthru
    _

</llo_original>
